<compile_context>
chip_gen: v5e
topology: v5e:2x2
jax: 0.10.0
libtpu: 0.0.40
codegen_flags: <defaults>
</compile_context>

<pallas_src>
import functools

import jax
import jax.numpy as jnp
from jax.experimental import pallas as pl
from jax.experimental.pallas import tpu as pltpu

_BN_EPS = 1e-5


def _vmem_budget_bytes():
    """Per-generation VMEM budget for the 'whole batch resident' fused path.

    v7x has 64 MiB of VMEM per TensorCore (vs 128 MiB on v5e/v6e); derive the budget
    from the reported capacity and fall back to the conservative v7x figure.
    """
    cap = 64 * 1024 * 1024
    try:
        cap = int(getattr(pltpu.get_tpu_info(), "vmem_capacity_bytes", cap))
    except Exception:
        pass
    return min(cap * 3 // 4, 96 * 1024 * 1024)   # <=48 MiB on v7x, <=96 MiB on v5e/v6e


# ---------------------------------------------------------------------------
# Fused path: whole (padded) batch resident in VMEM, single kernel invocation.
# ---------------------------------------------------------------------------
def _fused_kernel(fp_ref, w0h_ref, w0l_ref, b0_ref, g_ref, bt_ref,
                  w1_ref, b1_ref, w2_ref, b2_ref, out_ref, *, n_rows, n_pad):
    # h = relu(fp @ W0 + b0).  fp bits are exact in bf16; W0 arrives as a bf16 hi/lo
    # split -> two accumulating bf16 matmuls give ~f32 accuracy at full MXU rate.
    x = fp_ref[...].astype(jnp.float32).astype(jnp.bfloat16)
    h = jnp.dot(x, w0h_ref[...], preferred_element_type=jnp.float32)
    h = h + jnp.dot(x, w0l_ref[...], preferred_element_type=jnp.float32)
    h = jnp.maximum(h + b0_ref[...], 0.0)                           # [Bp, F]

    # Zero-padded tail rows contribute exactly relu(b0) each -> subtract analytically.
    h_pad = jnp.maximum(b0_ref[...], 0.0)                           # [1, F]
    inv_n = 1.0 / n_rows
    mean = (jnp.sum(h, axis=0, keepdims=True) - n_pad * h_pad) * inv_n
    d = h - mean
    dp = h_pad - mean
    # True centred (two-pass) variance: no E[x^2]-E[x]^2 cancellation.
    var = (jnp.sum(d * d, axis=0, keepdims=True) - n_pad * (dp * dp)) * inv_n
    var = jnp.maximum(var, 0.0)                                     # guard f32 rounding
    scale = g_ref[...] * jax.lax.rsqrt(var + _BN_EPS)
    shift = bt_ref[...] - mean * scale

    hn = h * scale + shift                                          # BatchNorm1d (train)
    h1 = jnp.maximum(
        jnp.dot(hn, w1_ref[...], preferred_element_type=jnp.float32) + b1_ref[...], 0.0)
    out = jnp.dot(h1, w2_ref[...], preferred_element_type=jnp.float32) + b2_ref[...]
    out_ref[...] = out.astype(out_ref.dtype)                        # natural 64-lane store


def _forward_fused(fp, w0h, w0l, b0, gamma, beta, w1, b1, w2, b2, *, b, b_pad, vmem_limit):
    nf = fp.shape[1]
    f_emb = w0h.shape[1]
    hidden = w1.shape[1]
    out_size = w2.shape[1]

    fp_p = fp if b_pad == b else jnp.pad(fp, ((0, b_pad - b), (0, 0)))
    full = lambda i: (0, 0)
    kernel = functools.partial(_fused_kernel, n_rows=float(b), n_pad=float(b_pad - b))

    out = pl.pallas_call(
        kernel,
        out_shape=jax.ShapeDtypeStruct((b_pad, out_size), jnp.float32),
        grid=(1,),
        in_specs=[pl.BlockSpec((b_pad, nf), full),
                  pl.BlockSpec((nf, f_emb), full),
                  pl.BlockSpec((nf, f_emb), full),
                  pl.BlockSpec((1, f_emb), full),
                  pl.BlockSpec((1, f_emb), full),
                  pl.BlockSpec((1, f_emb), full),
                  pl.BlockSpec((f_emb, hidden), full),
                  pl.BlockSpec((1, hidden), full),
                  pl.BlockSpec((hidden, out_size), full),
                  pl.BlockSpec((1, out_size), full)],
        out_specs=pl.BlockSpec((b_pad, out_size), full),
        compiler_params=pltpu.CompilerParams(
            dimension_semantics=("arbitrary",), vmem_limit_bytes=int(vmem_limit)),
    )(fp_p, w0h, w0l, b0, gamma, beta, w1, b1, w2, b2)

    # Contiguous row-prefix slice only when batch padding was actually added.
    return out if b_pad == b else out[:b]


# ---------------------------------------------------------------------------
# Two-pass path for batches too large to keep resident in VMEM.
# Pass 1: per-feature sum / sum-of-squares of h, sharded over both v7x cores.
# ---------------------------------------------------------------------------
def _stats_kernel(fp_ref, w0h_ref, w0l_ref, b0_ref, sum_ref, sq_ref):
    i = pl.program_id(1)

    @pl.when(i == 0)
    def _init():
        sum_ref[...] = jnp.zeros_like(sum_ref)
        sq_ref[...] = jnp.zeros_like(sq_ref)

    x = fp_ref[...].astype(jnp.float32).astype(jnp.bfloat16)
    h = jnp.dot(x, w0h_ref[...], preferred_element_type=jnp.float32)
    h = h + jnp.dot(x, w0l_ref[...], preferred_element_type=jnp.float32)
    h = jnp.maximum(h + b0_ref[...], 0.0)                           # [TB, F]

    # [8, F] per-core accumulator (kept 8-sublane tileable); the [1, F] tile reduction
    # broadcast-adds identically into every sublane row.  No tail masking: the padded
    # rows' exact contribution is subtracted once in the XLA glue.
    sum_ref[...] += jnp.sum(h, axis=0, keepdims=True)
    sq_ref[...] += jnp.sum(h * h, axis=0, keepdims=True)


# Pass 2: h = relu(fp@W0+b0); h1 = relu(h@W1_eff+b1_eff); out = h1@W2 + b2
# (BatchNorm already folded into W1_eff / b1_eff in the glue.)
def _apply_kernel(fp_ref, w0h_ref, w0l_ref, b0_ref, w1_ref, b1_ref, w2_ref, b2_ref, out_ref):
    x = fp_ref[...].astype(jnp.float32).astype(jnp.bfloat16)
    h = jnp.dot(x, w0h_ref[...], preferred_element_type=jnp.float32)
    h = h + jnp.dot(x, w0l_ref[...], preferred_element_type=jnp.float32)
    h = jnp.maximum(h + b0_ref[...], 0.0)                           # [TB, F]
    h1 = jnp.maximum(
        jnp.dot(h, w1_ref[...], preferred_element_type=jnp.float32) + b1_ref[...], 0.0)
    out = jnp.dot(h1, w2_ref[...], preferred_element_type=jnp.float32) + b2_ref[...]
    out_ref[...] = out.astype(out_ref.dtype)


def _forward_two_pass(fp, w0h, w0l, b0, gamma, beta, w1, b1, w2, b2, *, b, batch_tile):
    nf = fp.shape[1]
    f_emb = w0h.shape[1]
    hidden = w1.shape[1]
    out_size = w2.shape[1]

    tb = max(8, (min(int(batch_tile), 4096) // 8) * 8)
    b_pad = pl.cdiv(b, 2 * tb) * (2 * tb)          # divisible by 2*tb for the core split
    n_tiles = b_pad // tb
    tpc = n_tiles // 2                             # tiles per core
    fp_p = fp if b_pad == b else jnp.pad(fp, ((0, b_pad - b), (0, 0)))

    const2 = lambda c, i: (0, 0)
    vmem_limit = 32 * 1024 * 1024                  # per-tile footprint is only a few MiB

    # --- pass 1: full-batch BN statistics (both v7x TensorCores) ----------------------
    stats_shape = jax.ShapeDtypeStruct((2 * 8, f_emb), jnp.float32)
    sums, sqs = pl.pallas_call(
        _stats_kernel,
        out_shape=(stats_shape, stats_shape),
        grid=(2, tpc),
        in_specs=[pl.BlockSpec((tb, nf), lambda c, i: (c * tpc + i, 0)),
                  pl.BlockSpec((nf, f_emb), const2),
                  pl.BlockSpec((nf, f_emb), const2),
                  pl.BlockSpec((1, f_emb), const2)],
        out_specs=[pl.BlockSpec((8, f_emb), lambda c, i: (c, 0)),
                   pl.BlockSpec((8, f_emb), lambda c, i: (c, 0))],
        compiler_params=pltpu.CompilerParams(
            dimension_semantics=("parallel", "arbitrary"), vmem_limit_bytes=vmem_limit),
    )(fp_p, w0h, w0l, b0)

    # --- tiny XLA glue: pad correction + training-mode BN folded into fc1 -------------
    h_pad = jnp.maximum(b0[0], 0.0)                       # h of an all-zero padded row
    n_pad = float(b_pad - b)
    s1 = sums[0] + sums[8] - n_pad * h_pad                # rows 0 / 8 hold the per-core partials
    s2 = sqs[0] + sqs[8] - n_pad * (h_pad * h_pad)
    mean = s1 / b
    var = jnp.maximum(s2 / b - mean * mean, 0.0)          # one-pass var, clamped >= 0
    a = gamma[0] * jax.lax.rsqrt(var + _BN_EPS)           # [F]
    c = beta[0] - mean * a                                # [F]
    w1_eff = w1 * a[:, None]                              # [F, H]
    b1_eff = (c @ w1 + b1[0]).reshape(1, hidden)          # [1, H]

    # --- pass 2: matmul chain, parallel over batch tiles (both TCs on v7x) ------------
    const1 = lambda i: (0, 0)
    out = pl.pallas_call(
        _apply_kernel,
        out_shape=jax.ShapeDtypeStruct((b_pad, out_size), jnp.float32),
        grid=(n_tiles,),
        in_specs=[pl.BlockSpec((tb, nf), lambda i: (i, 0)),
                  pl.BlockSpec((nf, f_emb), const1),
                  pl.BlockSpec((nf, f_emb), const1),
                  pl.BlockSpec((1, f_emb), const1),
                  pl.BlockSpec((f_emb, hidden), const1),
                  pl.BlockSpec((1, hidden), const1),
                  pl.BlockSpec((hidden, out_size), const1),
                  pl.BlockSpec((1, out_size), const1)],
        out_specs=pl.BlockSpec((tb, out_size), lambda i: (i, 0)),
        compiler_params=pltpu.CompilerParams(
            dimension_semantics=("parallel",), vmem_limit_bytes=vmem_limit),
    )(fp_p, w0h, w0l, b0, w1_eff, b1_eff, w2, b2)

    return out if b_pad == b else out[:b]


# ---------------------------------------------------------------------------
# Public wrapper
# ---------------------------------------------------------------------------
def drug_encoder(fp, params, *, batch_tile=2048, max_fused_rows=None):
    """fp: [B, num_drug_fp] (int8 0/1 bits or float). Returns [B, out_size] float32."""
    w0, b0, gamma, beta, w1, b1, w2, b2 = params
    b, nf = fp.shape
    f_emb = w0.shape[1]
    hidden = w1.shape[1]
    out_size = w2.shape[1]

    # bf16 hi/lo split of the dominant (167 x 32) weight: x@w0h + x@w0l reproduces the
    # f32 matmul to ~1e-6 while running on the full-rate bf16 MXU path (key on v5e).
    w0h = w0.astype(jnp.bfloat16)
    w0l = (w0 - w0h.astype(jnp.float32)).astype(jnp.bfloat16)

    budget = _vmem_budget_bytes()
    if max_fused_rows is None:
        # Conservative resident-bytes-per-row estimate (fp int8 + bf16 copy + f32
        # h/centered/h1 + double-buffered out) with a 2x safety factor.
        per_row = 3 * nf + 4 * (3 * f_emb + hidden + 2 * out_size)
        max_fused_rows = budget // (2 * per_row)

    b8 = max(8, pl.cdiv(b, 8) * 8)
    if b8 <= max_fused_rows:
        return _forward_fused(fp, w0h, w0l, b0, gamma, beta, w1, b1, w2, b2,
                              b=b, b_pad=b8, vmem_limit=budget)
    return _forward_two_pass(fp, w0h, w0l, b0, gamma, beta, w1, b1, w2, b2,
                             b=b, batch_tile=batch_tile)


# ---------------------------------------------------------------------------
# Parameters / pure-JAX reference
# ---------------------------------------------------------------------------
def make_params(key, num_drug_fp=167, fp_embed_size=32, out_size=64):
    """Deterministic synthetic parameters (same shapes as the PyTorch module)."""
    ks = jax.random.split(key, 6)
    hidden = fp_embed_size // 2  # 16

    def lin(kw, kb, fan_in, fan_out):
        bound = 1.0 / jnp.sqrt(float(fan_in))
        w = jax.random.uniform(kw, (fan_in, fan_out), jnp.float32, -bound, bound)
        b_ = jax.random.uniform(kb, (1, fan_out), jnp.float32, -bound, bound)
        return w, b_

    w0, b0 = lin(ks[0], ks[1], num_drug_fp, fp_embed_size)   # dense_fp
    w1, b1 = lin(ks[2], ks[3], fp_embed_size, hidden)        # FC2.fc1
    w2, b2 = lin(ks[4], ks[5], hidden, out_size)             # FC2.fc2
    gamma = jnp.ones((1, fp_embed_size), jnp.float32)        # BN weight
    beta = jnp.zeros((1, fp_embed_size), jnp.float32)        # BN bias
    return (w0, b0, gamma, beta, w1, b1, w2, b2)


def reference(fp, params):
    """Pure-JAX reference of the same forward pass (textbook two-pass BN)."""
    w0, b0, gamma, beta, w1, b1, w2, b2 = params
    h = jnp.maximum(fp @ w0 + b0, 0.0)
    mean = jnp.mean(h, axis=0, keepdims=True)
    var = jnp.mean((h - mean) ** 2, axis=0, keepdims=True)
    hn = (h - mean) * jax.lax.rsqrt(var + _BN_EPS) * gamma + beta
    h1 = jnp.maximum(hn @ w1 + b1, 0.0)
    return h1 @ w2 + b2


if __name__ == "__main__":
    key = jax.random.PRNGKey(0)
    k_fp, k_fp2, k_params = jax.random.split(key, 3)

    NUM_FP = 167
    params = make_params(k_params, num_drug_fp=NUM_FP, fp_embed_size=32, out_size=64)

    # --- small batch: exercises the fused single-kernel path ---------------------------
    B = 8
    fp_bits = (jax.random.uniform(k_fp, (B, NUM_FP)) > 0.5).astype(jnp.int8)
    encode = jax.jit(drug_encoder)
    out = jax.block_until_ready(encode(fp_bits, params))
    ref = reference(fp_bits.astype(jnp.float32), params)
    assert out.shape == (B, 64)
    assert jnp.allclose(out, ref, atol=1e-4, rtol=1e-4), "fused path mismatch vs reference"

    # --- forced large-batch path: two-pass stats (dual-core split) + folded BN ---------
    B2 = 48
    fp_bits2 = (jax.random.uniform(k_fp2, (B2, NUM_FP)) > 0.5).astype(jnp.int8)
    encode2 = jax.jit(functools.partial(drug_encoder, batch_tile=16, max_fused_rows=0))
    out2 = jax.block_until_ready(encode2(fp_bits2, params))
    ref2 = reference(fp_bits2.astype(jnp.float32), params)
    assert out2.shape == (B2, 64)
    assert jnp.allclose(out2, ref2, atol=1e-4, rtol=1e-4), "two-pass path mismatch vs reference"

    print("KERNEL_OK")
</pallas_src>

<mosaic_0001>
module attributes {stable_mosaic.version = 11 : i64} {
  func.func @_fused_kernel(%arg0: i32, %arg1: memref<8x167xi8, #tpu.memory_space<vmem>>, %arg2: memref<167x32xbf16, #tpu.memory_space<vmem>>, %arg3: memref<167x32xbf16, #tpu.memory_space<vmem>>, %arg4: memref<1x32xf32, #tpu.memory_space<vmem>>, %arg5: memref<1x32xf32, #tpu.memory_space<vmem>>, %arg6: memref<1x32xf32, #tpu.memory_space<vmem>>, %arg7: memref<32x16xf32, #tpu.memory_space<vmem>>, %arg8: memref<1x16xf32, #tpu.memory_space<vmem>>, %arg9: memref<16x64xf32, #tpu.memory_space<vmem>>, %arg10: memref<1x64xf32, #tpu.memory_space<vmem>>, %arg11: memref<8x64xf32, #tpu.memory_space<vmem>>) attributes {dimension_semantics = [#tpu.dimension_semantics<arbitrary>], iteration_bounds = array<i64: 1>, scalar_prefetch = 0 : i64, scratch_operands = 0 : i64, tpu.core_type = #tpu.core_type<tc>, window_params = [{pipeline_mode = #tpu.pipeline_mode<synchronous>, transform_indices = @transform_0, window_bounds = array<i64: 8, 167>}, {pipeline_mode = #tpu.pipeline_mode<synchronous>, transform_indices = @transform_1, window_bounds = array<i64: 167, 32>}, {pipeline_mode = #tpu.pipeline_mode<synchronous>, transform_indices = @transform_2, window_bounds = array<i64: 167, 32>}, {pipeline_mode = #tpu.pipeline_mode<synchronous>, transform_indices = @transform_3, window_bounds = array<i64: 1, 32>}, {pipeline_mode = #tpu.pipeline_mode<synchronous>, transform_indices = @transform_4, window_bounds = array<i64: 1, 32>}, {pipeline_mode = #tpu.pipeline_mode<synchronous>, transform_indices = @transform_5, window_bounds = array<i64: 1, 32>}, {pipeline_mode = #tpu.pipeline_mode<synchronous>, transform_indices = @transform_6, window_bounds = array<i64: 32, 16>}, {pipeline_mode = #tpu.pipeline_mode<synchronous>, transform_indices = @transform_7, window_bounds = array<i64: 1, 16>}, {pipeline_mode = #tpu.pipeline_mode<synchronous>, transform_indices = @transform_8, window_bounds = array<i64: 16, 64>}, {pipeline_mode = #tpu.pipeline_mode<synchronous>, transform_indices = @transform_9, window_bounds = array<i64: 1, 64>}, {pipeline_mode = #tpu.pipeline_mode<synchronous>, transform_indices = @transform_10, window_bounds = array<i64: 8, 64>}]} {
    %c0 = arith.constant 0 : index
    %c0_0 = arith.constant 0 : index
    %0 = vector.load %arg1[%c0, %c0_0] : memref<8x167xi8, #tpu.memory_space<vmem>>, vector<8x167xi8>
    %1 = arith.sitofp %0 : vector<8x167xi8> to vector<8x167xf32>
    %2 = arith.truncf %1 : vector<8x167xf32> to vector<8x167xbf16>
    %c0_1 = arith.constant 0 : index
    %c0_2 = arith.constant 0 : index
    %3 = vector.load %arg2[%c0_1, %c0_2] : memref<167x32xbf16, #tpu.memory_space<vmem>>, vector<167x32xbf16>
    %cst = arith.constant dense<0.000000e+00> : vector<8x32xf32>
    %4 = tpu.matmul %2, %3, %cst {dimension_numbers = #tpu.dot_dimension_numbers<[1], [0], [0], [1], [0, 0, 1, 1], [], []>} : vector<8x167xbf16>, vector<167x32xbf16>, vector<8x32xf32> -> vector<8x32xf32>
    %c0_3 = arith.constant 0 : index
    %c0_4 = arith.constant 0 : index
    %5 = vector.load %arg3[%c0_3, %c0_4] : memref<167x32xbf16, #tpu.memory_space<vmem>>, vector<167x32xbf16>
    %cst_5 = arith.constant dense<0.000000e+00> : vector<8x32xf32>
    %6 = tpu.matmul %2, %5, %cst_5 {dimension_numbers = #tpu.dot_dimension_numbers<[1], [0], [0], [1], [0, 0, 1, 1], [], []>} : vector<8x167xbf16>, vector<167x32xbf16>, vector<8x32xf32> -> vector<8x32xf32>
    %7 = arith.addf %4, %6 : vector<8x32xf32>
    %c0_6 = arith.constant 0 : index
    %c0_7 = arith.constant 0 : index
    %8 = vector.load %arg4[%c0_6, %c0_7] : memref<1x32xf32, #tpu.memory_space<vmem>>, vector<1x32xf32>
    %9 = vector.broadcast %8 : vector<1x32xf32> to vector<8x32xf32>
    %10 = arith.addf %7, %9 : vector<8x32xf32>
    %cst_8 = arith.constant 0.000000e+00 : f32
    %11 = vector.broadcast %cst_8 : f32 to vector<8x32xf32>
    %12 = arith.maximumf %10, %11 : vector<8x32xf32>
    %c0_9 = arith.constant 0 : index
    %c0_10 = arith.constant 0 : index
    %13 = vector.load %arg4[%c0_9, %c0_10] : memref<1x32xf32, #tpu.memory_space<vmem>>, vector<1x32xf32>
    %cst_11 = arith.constant 0.000000e+00 : f32
    %14 = vector.broadcast %cst_11 : f32 to vector<1x32xf32>
    %15 = arith.maximumf %13, %14 : vector<1x32xf32>
    %cst_12 = arith.constant dense<0.000000e+00> : vector<32xf32>
    %16 = vector.multi_reduction <add>, %12, %cst_12 [0] : vector<8x32xf32> to vector<32xf32>
    %17 = vector.shape_cast %16 : vector<32xf32> to vector<1x32xf32>
    %cst_13 = arith.constant 0.000000e+00 : f32
    %18 = vector.broadcast %cst_13 : f32 to vector<1x32xf32>
    %19 = arith.mulf %18, %15 : vector<1x32xf32>
    %20 = arith.subf %17, %19 : vector<1x32xf32>
    %cst_14 = arith.constant 1.250000e-01 : f32
    %21 = vector.broadcast %cst_14 : f32 to vector<1x32xf32>
    %22 = arith.mulf %20, %21 : vector<1x32xf32>
    %23 = vector.broadcast %22 : vector<1x32xf32> to vector<8x32xf32>
    %24 = arith.subf %12, %23 : vector<8x32xf32>
    %25 = arith.subf %15, %22 : vector<1x32xf32>
    %26 = arith.mulf %24, %24 : vector<8x32xf32>
    %cst_15 = arith.constant dense<0.000000e+00> : vector<32xf32>
    %27 = vector.multi_reduction <add>, %26, %cst_15 [0] : vector<8x32xf32> to vector<32xf32>
    %28 = vector.shape_cast %27 : vector<32xf32> to vector<1x32xf32>
    %29 = arith.mulf %25, %25 : vector<1x32xf32>
    %cst_16 = arith.constant 0.000000e+00 : f32
    %30 = vector.broadcast %cst_16 : f32 to vector<1x32xf32>
    %31 = arith.mulf %30, %29 : vector<1x32xf32>
    %32 = arith.subf %28, %31 : vector<1x32xf32>
    %cst_17 = arith.constant 1.250000e-01 : f32
    %33 = vector.broadcast %cst_17 : f32 to vector<1x32xf32>
    %34 = arith.mulf %32, %33 : vector<1x32xf32>
    %cst_18 = arith.constant 0.000000e+00 : f32
    %35 = vector.broadcast %cst_18 : f32 to vector<1x32xf32>
    %36 = arith.maximumf %34, %35 : vector<1x32xf32>
    %c0_19 = arith.constant 0 : index
    %c0_20 = arith.constant 0 : index
    %37 = vector.load %arg5[%c0_19, %c0_20] : memref<1x32xf32, #tpu.memory_space<vmem>>, vector<1x32xf32>
    %cst_21 = arith.constant 9.99999974E-6 : f32
    %38 = vector.broadcast %cst_21 : f32 to vector<1x32xf32>
    %39 = arith.addf %36, %38 : vector<1x32xf32>
    %40 = math.rsqrt %39 : vector<1x32xf32>
    %41 = arith.mulf %37, %40 : vector<1x32xf32>
    %c0_22 = arith.constant 0 : index
    %c0_23 = arith.constant 0 : index
    %42 = vector.load %arg6[%c0_22, %c0_23] : memref<1x32xf32, #tpu.memory_space<vmem>>, vector<1x32xf32>
    %43 = arith.mulf %22, %41 : vector<1x32xf32>
    %44 = arith.subf %42, %43 : vector<1x32xf32>
    %45 = vector.broadcast %41 : vector<1x32xf32> to vector<8x32xf32>
    %46 = arith.mulf %12, %45 : vector<8x32xf32>
    %47 = vector.broadcast %44 : vector<1x32xf32> to vector<8x32xf32>
    %48 = arith.addf %46, %47 : vector<8x32xf32>
    %c0_24 = arith.constant 0 : index
    %c0_25 = arith.constant 0 : index
    %49 = vector.load %arg7[%c0_24, %c0_25] : memref<32x16xf32, #tpu.memory_space<vmem>>, vector<32x16xf32>
    %cst_26 = arith.constant dense<0.000000e+00> : vector<8x16xf32>
    %50 = tpu.matmul %48, %49, %cst_26 {dimension_numbers = #tpu.dot_dimension_numbers<[1], [0], [0], [1], [0, 0, 1, 1], [], []>} : vector<8x32xf32>, vector<32x16xf32>, vector<8x16xf32> -> vector<8x16xf32>
    %c0_27 = arith.constant 0 : index
    %c0_28 = arith.constant 0 : index
    %51 = vector.load %arg8[%c0_27, %c0_28] : memref<1x16xf32, #tpu.memory_space<vmem>>, vector<1x16xf32>
    %52 = vector.broadcast %51 : vector<1x16xf32> to vector<8x16xf32>
    %53 = arith.addf %50, %52 : vector<8x16xf32>
    %cst_29 = arith.constant 0.000000e+00 : f32
    %54 = vector.broadcast %cst_29 : f32 to vector<8x16xf32>
    %55 = arith.maximumf %53, %54 : vector<8x16xf32>
    %c0_30 = arith.constant 0 : index
    %c0_31 = arith.constant 0 : index
    %56 = vector.load %arg9[%c0_30, %c0_31] : memref<16x64xf32, #tpu.memory_space<vmem>>, vector<16x64xf32>
    %cst_32 = arith.constant dense<0.000000e+00> : vector<8x64xf32>
    %57 = tpu.matmul %55, %56, %cst_32 {dimension_numbers = #tpu.dot_dimension_numbers<[1], [0], [0], [1], [0, 0, 1, 1], [], []>} : vector<8x16xf32>, vector<16x64xf32>, vector<8x64xf32> -> vector<8x64xf32>
    %c0_33 = arith.constant 0 : index
    %c0_34 = arith.constant 0 : index
    %58 = vector.load %arg10[%c0_33, %c0_34] : memref<1x64xf32, #tpu.memory_space<vmem>>, vector<1x64xf32>
    %59 = vector.broadcast %58 : vector<1x64xf32> to vector<8x64xf32>
    %60 = arith.addf %57, %59 : vector<8x64xf32>
    %c0_35 = arith.constant 0 : index
    %c0_36 = arith.constant 0 : index
    %61 = vector.load %arg11[%c0_35, %c0_36] : memref<8x64xf32, #tpu.memory_space<vmem>>, vector<8x64xf32>
    tpu.vector_store %arg11[%c0_35, %c0_36], %60 {strides = array<i32>} : memref<8x64xf32, #tpu.memory_space<vmem>>, vector<8x64xf32>,
    return
  }
  func.func @transform_0(%arg0: i32) -> (i32, i32) {
    %c0_i32 = arith.constant 0 : i32
    %c0_i32_0 = arith.constant 0 : i32
    %c0_i32_1 = arith.constant 0 : i32
    return %c0_i32, %c0_i32_0 : i32, i32
  }
  func.func @transform_1(%arg0: i32) -> (i32, i32) {
    %c0_i32 = arith.constant 0 : i32
    %c0_i32_0 = arith.constant 0 : i32
    %c0_i32_1 = arith.constant 0 : i32
    return %c0_i32, %c0_i32_0 : i32, i32
  }
  func.func @transform_2(%arg0: i32) -> (i32, i32) {
    %c0_i32 = arith.constant 0 : i32
    %c0_i32_0 = arith.constant 0 : i32
    %c0_i32_1 = arith.constant 0 : i32
    return %c0_i32, %c0_i32_0 : i32, i32
  }
  func.func @transform_3(%arg0: i32) -> (i32, i32) {
    %c0_i32 = arith.constant 0 : i32
    %c0_i32_0 = arith.constant 0 : i32
    %c0_i32_1 = arith.constant 0 : i32
    return %c0_i32, %c0_i32_0 : i32, i32
  }
  func.func @transform_4(%arg0: i32) -> (i32, i32) {
    %c0_i32 = arith.constant 0 : i32
    %c0_i32_0 = arith.constant 0 : i32
    %c0_i32_1 = arith.constant 0 : i32
    return %c0_i32, %c0_i32_0 : i32, i32
  }
  func.func @transform_5(%arg0: i32) -> (i32, i32) {
    %c0_i32 = arith.constant 0 : i32
    %c0_i32_0 = arith.constant 0 : i32
    %c0_i32_1 = arith.constant 0 : i32
    return %c0_i32, %c0_i32_0 : i32, i32
  }
  func.func @transform_6(%arg0: i32) -> (i32, i32) {
    %c0_i32 = arith.constant 0 : i32
    %c0_i32_0 = arith.constant 0 : i32
    %c0_i32_1 = arith.constant 0 : i32
    return %c0_i32, %c0_i32_0 : i32, i32
  }
  func.func @transform_7(%arg0: i32) -> (i32, i32) {
    %c0_i32 = arith.constant 0 : i32
    %c0_i32_0 = arith.constant 0 : i32
    %c0_i32_1 = arith.constant 0 : i32
    return %c0_i32, %c0_i32_0 : i32, i32
  }
  func.func @transform_8(%arg0: i32) -> (i32, i32) {
    %c0_i32 = arith.constant 0 : i32
    %c0_i32_0 = arith.constant 0 : i32
    %c0_i32_1 = arith.constant 0 : i32
    return %c0_i32, %c0_i32_0 : i32, i32
  }
  func.func @transform_9(%arg0: i32) -> (i32, i32) {
    %c0_i32 = arith.constant 0 : i32
    %c0_i32_0 = arith.constant 0 : i32
    %c0_i32_1 = arith.constant 0 : i32
    return %c0_i32, %c0_i32_0 : i32, i32
  }
  func.func @transform_10(%arg0: i32) -> (i32, i32) {
    %c0_i32 = arith.constant 0 : i32
    %c0_i32_0 = arith.constant 0 : i32
    %c0_i32_1 = arith.constant 0 : i32
    return %c0_i32, %c0_i32_0 : i32, i32
  }
}

</mosaic_0001>

<llo_original>
// kernel: drug_encoder.1
$region0: #{drug_encoder.1}
  #allocation0 [shape = 'u32[]', space=smem, size = 0x4, offset = 0x4, fixed_abs, tag = 'smem constant byte address 0x4 - core index']
  #allocation1 [shape = 'u32[72,128]{1,0:T(1,128)}', space=vmem, size = 0x9000, scoped, tag = 'internal scratch']
  %s0 = inlined_call_operand.vmem [shape: s8[8,167], index: 0, kind: input, shape index: {}]
  %s1 = inlined_call_operand.vmem [shape: bf16[167,32], index: 1, kind: input, shape index: {}]
  %s2 = inlined_call_operand.vmem [shape: bf16[167,32], index: 2, kind: input, shape index: {}]
  %s3 = inlined_call_operand.vmem [shape: f32[1,32], index: 3, kind: input, shape index: {}]
  %s4 = inlined_call_operand.vmem [shape: f32[1,32], index: 4, kind: input, shape index: {}]
  %s5 = inlined_call_operand.vmem [shape: f32[1,32], index: 5, kind: input, shape index: {}]
  %s6 = inlined_call_operand.vmem [shape: f32[32,16], index: 6, kind: input, shape index: {}]
  %s7 = inlined_call_operand.vmem [shape: f32[1,16], index: 7, kind: input, shape index: {}]
  %s8 = inlined_call_operand.vmem [shape: f32[16,64], index: 8, kind: input, shape index: {}]
  %s9 = inlined_call_operand.vmem [shape: f32[1,64], index: 9, kind: input, shape index: {}]
  %s10 = inlined_call_operand.hbm [shape: f32[8,64], index: 10, kind: output, shape index: {}]
  %s11 = sld [smem:[#allocation0]]
  $region50: #{drug_encoder.1} parent=0
    _
  %s13 = ssub.s32 1, %s11
  %s14 = scalar_select 0, %s13, %s11
  $region1: #{drug_encoder.1} parent=0
    #allocation2 [shape = 'u8[4096]{0}', space=vmem, size = 0x1000, scoped, tag = 'output window, operand 0, single buffered']
    #allocation3 [shape = 's32[1]{0}', space=sflag, size = 0x4, scoped, tag = 'scoped memory for drug_encoder.1']
    %15 = vsyncpa [#allocation3], 0
    // Predicated region
    $region2: #{drug_encoder.1} parent=1 // pred_check
      _
    $region3: #{drug_encoder.1} parent=1 // pred_check_branch
      %17 = sbr.rel (0) target = $region5
    $region4: #{drug_encoder.1} parent=1 // pred_region
      _
    $region5: #{drug_encoder.1} parent=1 // pred_fallthru
      _
    // Predicated region
    $region6: #{drug_encoder.1} parent=1 // pred_check
      _
    $region7: #{drug_encoder.1} parent=1 // pred_check_branch
      %19 = sbr.rel (0) target = $region9
    $region8: #{drug_encoder.1} parent=1 // pred_region
      _
    $region9: #{drug_encoder.1} parent=1 // pred_fallthru
      _
    // Predicated region
    $region10: #{drug_encoder.1} parent=1 // pred_check
      _
    $region11: #{drug_encoder.1} parent=1 // pred_check_branch
      %21 = sbr.rel (0) target = $region13
    $region12: #{drug_encoder.1} parent=1 // pred_region
      _
    $region13: #{drug_encoder.1} parent=1 // pred_fallthru
      _
    // Predicated region
    $region14: #{drug_encoder.1} parent=1 // pred_check
      _
    $region15: #{drug_encoder.1} parent=1 // pred_check_branch
      %23 = sbr.rel (0) target = $region17
    $region16: #{drug_encoder.1} parent=1 // pred_region
      _
    $region17: #{drug_encoder.1} parent=1 // pred_fallthru
      _
    // Predicated region
    $region18: #{drug_encoder.1} parent=1 // pred_check
      _
    $region19: #{drug_encoder.1} parent=1 // pred_check_branch
      %25 = sbr.rel (0) target = $region21
    $region20: #{drug_encoder.1} parent=1 // pred_region
      _
    $region21: #{drug_encoder.1} parent=1 // pred_fallthru
      _
    // Predicated region
    $region22: #{drug_encoder.1} parent=1 // pred_check
      _
    $region23: #{drug_encoder.1} parent=1 // pred_check_branch
      %27 = sbr.rel (0) target = $region25
    $region24: #{drug_encoder.1} parent=1 // pred_region
      _
    $region25: #{drug_encoder.1} parent=1 // pred_fallthru
      _
    // Predicated region
    $region26: #{drug_encoder.1} parent=1 // pred_check
      _
    $region27: #{drug_encoder.1} parent=1 // pred_check_branch
      %29 = sbr.rel (0) target = $region29
    $region28: #{drug_encoder.1} parent=1 // pred_region
      _
    $region29: #{drug_encoder.1} parent=1 // pred_fallthru
      _
    // Predicated region
    $region30: #{drug_encoder.1} parent=1 // pred_check
      _
    $region31: #{drug_encoder.1} parent=1 // pred_check_branch
      %31 = sbr.rel (0) target = $region33
    $region32: #{drug_encoder.1} parent=1 // pred_region
      _
    $region33: #{drug_encoder.1} parent=1 // pred_fallthru
      _
    // Predicated region
    $region34: #{drug_encoder.1} parent=1 // pred_check
      _
    $region35: #{drug_encoder.1} parent=1 // pred_check_branch
      %33 = sbr.rel (0) target = $region37
    $region36: #{drug_encoder.1} parent=1 // pred_region
      _
    $region37: #{drug_encoder.1} parent=1 // pred_fallthru
      _
    // Predicated region
    $region38: #{drug_encoder.1} parent=1 // pred_check
      _
    $region39: #{drug_encoder.1} parent=1 // pred_check_branch
      %35 = sbr.rel (0) target = $region41
    $region40: #{drug_encoder.1} parent=1 // pred_region
      _
    $region41: #{drug_encoder.1} parent=1 // pred_fallthru
      _
    %v37 = vld [vmem:[%s0] sm:$0xf]
    %v38 = vunpack.c.0.s8 %v37
    %v39 = vunpack.c.1.s8 %v37
    %v40 = vcvt.s32.f32 %v38
    %v41 = vcvt.s32.f32 %v39
    %v42 = vpack.c.bf16 %v40, %v40
    %v43 = vpack.c.bf16 %v41, %v41
    %v44 = vld [vmem:[%s1] sm:$0xf]
    %v45 = vld [vmem:[%s1 + $0x4] sm:$0xf]
    %v46 = vld [vmem:[%s1 + $0x8] sm:$0xf]
    %v47 = vld [vmem:[%s1 + $0xc] sm:$0xf]
    %v48 = vld [vmem:[%s1 + $0x10] sm:$0xf]
    %v49 = vld [vmem:[%s1 + $0x14] sm:$0xf]
    %v50 = vld [vmem:[%s1 + $0x18] sm:$0xf]
    %v51 = vld [vmem:[%s1 + $0x1c] sm:$0xf]
    %v52 = vld [vmem:[%s1 + $0x20] sm:$0xf]
    %v53 = vld [vmem:[%s1 + $0x24] sm:$0xf]
    %v54 = vld [vmem:[%s1 + $0x28] sm:$0xf]
    %v55 = vld [vmem:[%s1 + $0x2c] sm:$0xf]
    %v56 = vld [vmem:[%s1 + $0x30] sm:$0xf]
    %v57 = vld [vmem:[%s1 + $0x34] sm:$0xf]
    %v58 = vld [vmem:[%s1 + $0x38] sm:$0xf]
    %v59 = vld [vmem:[%s1 + $0x3c] sm:$0xf]
    %v60 = vld [vmem:[%s1 + $0x40] sm:$0xf]
    %v61 = vld [vmem:[%s1 + $0x44] sm:$0xf]
    %v62 = vld [vmem:[%s1 + $0x48] sm:$0xf]
    %v63 = vld [vmem:[%s1 + $0x4c] sm:$0xf]
    %v64 = vld [vmem:[%s1 + $0x50] sm:$0xf]
    %v65 = vld [vmem:[%s2] sm:$0xf]
    %v66 = vld [vmem:[%s2 + $0x4] sm:$0xf]
    %v67 = vld [vmem:[%s2 + $0x8] sm:$0xf]
    %v68 = vld [vmem:[%s2 + $0xc] sm:$0xf]
    %v69 = vld [vmem:[%s2 + $0x10] sm:$0xf]
    %v70 = vld [vmem:[%s2 + $0x14] sm:$0xf]
    %v71 = vld [vmem:[%s2 + $0x18] sm:$0xf]
    %v72 = vld [vmem:[%s2 + $0x1c] sm:$0xf]
    %v73 = vld [vmem:[%s2 + $0x20] sm:$0xf]
    %v74 = vld [vmem:[%s2 + $0x24] sm:$0xf]
    %v75 = vld [vmem:[%s2 + $0x28] sm:$0xf]
    %v76 = vld [vmem:[%s2 + $0x2c] sm:$0xf]
    %v77 = vld [vmem:[%s2 + $0x30] sm:$0xf]
    %v78 = vld [vmem:[%s2 + $0x34] sm:$0xf]
    %v79 = vld [vmem:[%s2 + $0x38] sm:$0xf]
    %v80 = vld [vmem:[%s2 + $0x3c] sm:$0xf]
    %v81 = vld [vmem:[%s2 + $0x40] sm:$0xf]
    %v82 = vld [vmem:[%s2 + $0x44] sm:$0xf]
    %v83 = vld [vmem:[%s2 + $0x48] sm:$0xf]
    %v84 = vld [vmem:[%s2 + $0x4c] sm:$0xf]
    %v85 = vld [vmem:[%s2 + $0x50] sm:$0xf]
    %v107 = vunpack.c.l.b16 %v65
    %v108 = vunpack.c.l.b16 %v66
    %v109 = vunpack.c.l.b16 %v67
    %v110 = vunpack.c.l.b16 %v68
    %v111 = vunpack.c.l.b16 %v69
    %v112 = vunpack.c.l.b16 %v70
    %v113 = vunpack.c.l.b16 %v71
    %v114 = vunpack.c.l.b16 %v72
    %v115 = vunpack.c.l.b16 %v73
    %v116 = vunpack.c.l.b16 %v74
    %v117 = vunpack.c.l.b16 %v75
    %v118 = vunpack.c.l.b16 %v76
    %v119 = vunpack.c.l.b16 %v77
    %v120 = vunpack.c.l.b16 %v78
    %v121 = vunpack.c.l.b16 %v79
    %v122 = vunpack.c.l.b16 %v80
    %v123 = vunpack.c.l.b16 %v81
    %v124 = vunpack.c.l.b16 %v82
    %v125 = vunpack.c.l.b16 %v83
    %v126 = vunpack.c.l.b16 %v84
    %v127 = vunpack.c.l.b16 %v85
    %v128 = vpack.c.b16 %v108, %v107
    %v129 = vpack.c.b16 %v110, %v109
    %v130 = vpack.c.b16 %v112, %v111
    %v131 = vpack.c.b16 %v114, %v113
    %v132 = vpack.c.b16 %v116, %v115
    %v133 = vpack.c.b16 %v118, %v117
    %v134 = vpack.c.b16 %v120, %v119
    %v135 = vpack.c.b16 %v122, %v121
    %v136 = vpack.c.b16 %v124, %v123
    %v137 = vpack.c.b16 %v126, %v125
    %v138 = vpack.c.b16 %v127, %v127
    %vm149 = vcmask 318464
    %v151 = vsel %vm149, %v43, 0
    %vm153 = vcmask 1042432
    %vm154 = vcmask 1043456
    %v155 = vsel %vm153, 4294967295, 65535
    %v156 = vsel %vm154, %v155, 0
    %v158 = vand.u32 %v138, %v156
    %160 = vmatpush.bf16.msra.mxu0 %v135
    %161 = vmatpush.bf16.msra.mxu0 %v134
    %162 = vmatpush.bf16.msra.mxu0 %v133
    %163 = vmatpush.bf16.msra.mxu0 %v132
    %164 = vmatpush.bf16.msra.mxu0 %v131
    %165 = vmatpush.bf16.msra.mxu0 %v130
    %166 = vmatpush.bf16.msra.mxu0 %v129
    %167 = vmatpush.bf16.msra.mxu0 %v128
    %168 = vmatmul.bf16.gmra.mxu0 %v42
    %v169 = vpop.f32.mrf.mxu0
    %v170 = vadd.f32 0.0, %v169
    %v171 = vpop.f32.mrf.mxu0
    %172 = vdwg.mxu0
    %173 = vmatpush.bf16.msra.mxu0 0
    %174 = vmatpush.bf16.msra.mxu0 0
    %175 = vmatpush.bf16.msra.mxu0 0
    %176 = vmatpush.bf16.msra.mxu0 0
    %177 = vmatpush.bf16.msra.mxu0 0
    %178 = vmatpush.bf16.msra.mxu0 %v158
    %179 = vmatpush.bf16.msra.mxu0 %v137
    %180 = vmatpush.bf16.msra.mxu0 %v136
    %181 = vmatmul.bf16.gmra.mxu0 %v151
    %v182 = vpop.f32.mrf.mxu0
    %v183 = vadd.f32 %v170, %v182
    %v184 = vpop.f32.mrf.mxu0
    %185 = vdwg.mxu0
    %v207 = vunpack.c.l.b16 %v44
    %v208 = vunpack.c.l.b16 %v45
    %v209 = vunpack.c.l.b16 %v46
    %v210 = vunpack.c.l.b16 %v47
    %v211 = vunpack.c.l.b16 %v48
    %v212 = vunpack.c.l.b16 %v49
    %v213 = vunpack.c.l.b16 %v50
    %v214 = vunpack.c.l.b16 %v51
    %v215 = vunpack.c.l.b16 %v52
    %v216 = vunpack.c.l.b16 %v53
    %v217 = vunpack.c.l.b16 %v54
    %v218 = vunpack.c.l.b16 %v55
    %v219 = vunpack.c.l.b16 %v56
    %v220 = vunpack.c.l.b16 %v57
    %v221 = vunpack.c.l.b16 %v58
    %v222 = vunpack.c.l.b16 %v59
    %v223 = vunpack.c.l.b16 %v60
    %v224 = vunpack.c.l.b16 %v61
    %v225 = vunpack.c.l.b16 %v62
    %v226 = vunpack.c.l.b16 %v63
    %v227 = vunpack.c.l.b16 %v64
    %v228 = vpack.c.b16 %v208, %v207
    %v229 = vpack.c.b16 %v210, %v209
    %v230 = vpack.c.b16 %v212, %v211
    %v231 = vpack.c.b16 %v214, %v213
    %v232 = vpack.c.b16 %v216, %v215
    %v233 = vpack.c.b16 %v218, %v217
    %v234 = vpack.c.b16 %v220, %v219
    %v235 = vpack.c.b16 %v222, %v221
    %v236 = vpack.c.b16 %v224, %v223
    %v237 = vpack.c.b16 %v226, %v225
    %v238 = vpack.c.b16 %v227, %v227
    %v250 = vand.u32 %v238, %v156
    %252 = vmatpush.bf16.msra.mxu0 %v235
    %253 = vmatpush.bf16.msra.mxu0 %v234
    %254 = vmatpush.bf16.msra.mxu0 %v233
    %255 = vmatpush.bf16.msra.mxu0 %v232
    %256 = vmatpush.bf16.msra.mxu0 %v231
    %257 = vmatpush.bf16.msra.mxu0 %v230
    %258 = vmatpush.bf16.msra.mxu0 %v229
    %259 = vmatpush.bf16.msra.mxu0 %v228
    %260 = vmatmul.bf16.gmra.mxu0 %v42
    %v261 = vpop.f32.mrf.mxu0
    %v262 = vadd.f32 %v183, %v261
    %v263 = vpop.f32.mrf.mxu0
    %264 = vdwg.mxu0
    %265 = vmatpush.bf16.msra.mxu0 0
    %266 = vmatpush.bf16.msra.mxu0 0
    %267 = vmatpush.bf16.msra.mxu0 0
    %268 = vmatpush.bf16.msra.mxu0 0
    %269 = vmatpush.bf16.msra.mxu0 0
    %270 = vmatpush.bf16.msra.mxu0 %v250
    %271 = vmatpush.bf16.msra.mxu0 %v237
    %272 = vmatpush.bf16.msra.mxu0 %v236
    %273 = vmatmul.bf16.gmra.mxu0 %v151
    %v274 = vpop.f32.mrf.mxu0
    %v275 = vadd.f32 %v262, %v274
    %v276 = vpop.f32.mrf.mxu0
    %277 = vdwg.mxu0
    %v278 = vld [vmem:[%s3] sm:$0x1]
    %v280 = vperm.slane %v278, 0
    %v282 = vadd.f32 %v275, %v280
    %v283 = vmax.f32 %v282, 0.0
    %v284 = vmax.f32 %v278, 0.0
    %vm285 = vcmask 261120
    %v286 = vsel %vm285, %v283, 0.0
    %v287 = vrot.slane %v286, 4
    %v288 = vadd.f32 %v286, %v287
    %v289 = vrot.slane %v288, 2
    %v290 = vadd.f32 %v288, %v289
    %v291 = vrot.slane %v290, 1
    %v292 = vadd.f32 %v290, %v291
    %v293 = vmul.f32 %v284, 0.0
    %v294 = vsub.f32 %v292, %v293
    %v295 = vmul.f32 %v294, 0.125
    %v296 = vperm.slane %v295, 0
    %v297 = vsub.f32 %v283, %v296
    %v298 = vsub.f32 %v284, %v295
    %v299 = vmul.f32 %v297, %v297
    %v300 = vsel %vm285, %v299, 0.0
    %v301 = vrot.slane %v300, 4
    %v302 = vadd.f32 %v300, %v301
    %v303 = vrot.slane %v302, 2
    %v304 = vadd.f32 %v302, %v303
    %v305 = vrot.slane %v304, 1
    %v306 = vadd.f32 %v304, %v305
    %v307 = vmul.f32 %v298, %v298
    %v308 = vmul.f32 %v307, 0.0
    %v309 = vsub.f32 %v306, %v308
    %v310 = vmul.f32 %v309, 0.125
    %v311 = vmax.f32 %v310, 0.0
    %v312 = vld [vmem:[%s4] sm:$0x1]
    %v313 = vadd.f32 %v311, 1e-05
    %v314 = vrsqrt.pop %v313
    %v315 = vmul.f32 %v314, %v313
    %v316 = vmul.f32 %v315, %v314
    %v317 = vmul.f32 0.5, %v316
    %v318 = vsub.f32 1.5, %v317
    %v319 = vmul.f32 %v314, %v318
    %vm320 = vweird.f32 %v313
    %vm321 = vweird.f32 %v314
    %vm322 = vmor %vm320, %vm321
    %v323 = vsel %vm322, %v314, %v319
    %v324 = vmul.f32 %v312, %v323
    %v325 = vld [vmem:[%s5] sm:$0x1]
    %v326 = vmul.f32 %v295, %v324
    %v327 = vsub.f32 %v325, %v326
    %v329 = vperm.slane %v324, 0
    %v331 = vmul.f32 %v283, %v329
    %v333 = vperm.slane %v327, 0
    %v335 = vadd.f32 %v331, %v333
    %v336 = vld [vmem:[%s6] sm:$0xff]
    %v337 = vld [vmem:[%s6 + $0x8] sm:$0xff]
    %v338 = vld [vmem:[%s6 + $0x10] sm:$0xff]
    %v339 = vld [vmem:[%s6 + $0x18] sm:$0xff]
    %v340 = vld [vmem:[%s7] sm:$0x1]
    %v342 = vperm.slane %v340, 0
    %v345 = vsel %vm285, %v335, 0
    %347 = vmatpush.msra.mxu0 0.0
    %348 = vmatpush.msra.mxu0 0.0
    %349 = vmatpush.msra.mxu0 0.0
    %350 = vmatpush.msra.mxu0 0.0
    %351 = vmatpush.msra.mxu0 0.0
    %352 = vmatpush.msra.mxu0 0.0
    %353 = vmatpush.msra.mxu0 0.0
    %354 = vmatpush.msra.mxu0 0.0
    %355 = vmatpush.msra.mxu0 0.0
    %356 = vmatpush.msra.mxu0 0.0
    %357 = vmatpush.msra.mxu0 0.0
    %358 = vmatpush.msra.mxu0 0.0
    %359 = vmatpush.msra.mxu0 %v339
    %360 = vmatpush.msra.mxu0 %v338
    %361 = vmatpush.msra.mxu0 %v337
    %362 = vmatpush.msra.mxu0 %v336
    %363 = vmatmul.f32.gmra.mxu0 %v345
    %v364 = vpop.f32.mrf.mxu0
    %v365 = vadd.f32 %v342, %v364
    %366 = vdwg.mxu0
    %v367 = vmax.f32 %v365, 0.0
    %v368 = vld [vmem:[%s8] sm:$0xff]
    %v369 = vld [vmem:[%s8 + $0x8] sm:$0xff]
    %v370 = vld [vmem:[%s9] sm:$0x1]
    %v372 = vperm.slane %v370, 0
    %vm374 = vcmask 130048
    %v376 = vsel %vm374, %v367, 0
    %378 = vmatpush.msra.mxu0 0.0
    %379 = vmatpush.msra.mxu0 0.0
    %380 = vmatpush.msra.mxu0 0.0
    %381 = vmatpush.msra.mxu0 0.0
    %382 = vmatpush.msra.mxu0 0.0
    %383 = vmatpush.msra.mxu0 0.0
    %384 = vmatpush.msra.mxu0 0.0
    %385 = vmatpush.msra.mxu0 0.0
    %386 = vmatpush.msra.mxu0 0.0
    %387 = vmatpush.msra.mxu0 0.0
    %388 = vmatpush.msra.mxu0 0.0
    %389 = vmatpush.msra.mxu0 0.0
    %390 = vmatpush.msra.mxu0 0.0
    %391 = vmatpush.msra.mxu0 0.0
    %392 = vmatpush.msra.mxu0 %v369
    %393 = vmatpush.msra.mxu0 %v368
    %394 = vmatmul.f32.gmra.mxu0 %v376
    %v395 = vpop.f32.mrf.mxu0
    %v396 = vadd.f32 %v372, %v395
    %397 = vdwg.mxu0
    %vm398 = vcmask 523264
    %399 = vst.msk [vmem:[#allocation2] sm:$0xff] %vm398, %v396
    // Predicated region
    $region42: #{drug_encoder.1} parent=1 // pred_check
      _
    $region43: #{drug_encoder.1} parent=1 // pred_check_branch
      %401 = sbr.rel (0) target = $region45
    $region44: #{drug_encoder.1} parent=1 // pred_region
      %403 = vsyncadd [#allocation3], 0
      %s405 = sshll.u32 [#allocation2], 4
      %s406 = int_to_ptr.vmem [resolvable:$true] %s405
      %s407 = sshll.u32 %s10, 4
      %s408 = int_to_ptr.hbm [resolvable:$true] %s407
      %410 = dma.vmem_to_hbm [thread:$0]  %s406, 128, %s408, [#allocation3]
    $region45: #{drug_encoder.1} parent=1 // pred_fallthru
      _
    // Predicated region
    $region46: #{drug_encoder.1} parent=1 // pred_check
      _
    $region47: #{drug_encoder.1} parent=1 // pred_check_branch
      %412 = sbr.rel (0) target = $region49
    $region48: #{drug_encoder.1} parent=1 // pred_region
      %414 = dma.done [#allocation3], 128
    $region49: #{drug_encoder.1} parent=1 // pred_fallthru
      _
    %415 = vsyncpa [#allocation3], 1

</llo_original>
